<compile_context>
chip_gen: v7x
topology: tpu7x:2x2x1
jax: 0.10.0
libtpu: 0.0.40
codegen_flags: <defaults>
</compile_context>

<pallas_src>
import jax
import jax.numpy as jnp
from jax.experimental import pallas as pl
from jax.experimental.pallas import tpu as pltpu


def _round_up(x, m):
    return ((x + m - 1) // m) * m


def dqn_kernel(x_ref, w1_ref, b1_ref, w2_ref, b2_ref, w3_ref, b3_ref, o_ref):
    # fc1 + ReLU: MXU matmul with f32 accumulation; bias add + max on VPU.
    h1 = jnp.dot(x_ref[...], w1_ref[...], preferred_element_type=jnp.float32)
    h1 = jnp.maximum(h1 + b1_ref[...], 0.0)
    # fc2 + ReLU
    h2 = jnp.dot(h1.astype(w2_ref.dtype), w2_ref[...],
                 preferred_element_type=jnp.float32)
    h2 = jnp.maximum(h2 + b2_ref[...], 0.0)
    # fc3 (linear), bias added on the f32 accumulator.
    out = jnp.dot(h2.astype(w3_ref.dtype), w3_ref[...],
                  preferred_element_type=jnp.float32)
    o_ref[...] = (out + b3_ref[...]).astype(o_ref.dtype)


def prepare_params(params, compute_dtype=jnp.float32):
    """One-time parameter prep, hoisted out of the per-call forward path.

    Weights are cast to the matmul compute dtype; biases stay f32 as (1, out)
    rows (added to the f32 accumulator inside the kernel)."""
    w1, b1, w2, b2, w3, b3 = params
    cd, f32 = compute_dtype, jnp.float32
    return (w1.astype(cd), jnp.reshape(b1, (1, -1)).astype(f32),
            w2.astype(cd), jnp.reshape(b2, (1, -1)).astype(f32),
            w3.astype(cd), jnp.reshape(b3, (1, -1)).astype(f32))


def dqn_forward(x, prepared, *, block_b=2048):
    """x: (B, input_size) f32 -> (B, output_size) f32."""
    w1, b1, w2, b2, w3, b3 = prepared
    B, in_size = x.shape
    out_size = w3.shape[1]
    cd = w1.dtype

    # Fat batch tile (amortizes per-grid-step overhead), sublane-aligned.
    # Feature dims stay UNPADDED in HBM: full-extent last dims (32-wide in,
    # 4-wide out) are legal block shapes.
    tb = min(block_b, _round_up(B, 8))
    b_pad = _round_up(B, tb)

    xc = x.astype(cd)                     # no-op in the f32 path
    if b_pad != B:                        # only pad batch when needed
        xc = jnp.zeros((b_pad, in_size), cd).at[:B].set(xc)

    vmem = pltpu.MemorySpace.VMEM

    def resident(arr):
        # Same block every grid step -> operand stays VMEM-resident.
        return pl.BlockSpec(arr.shape, lambda i: (0, 0), memory_space=vmem)

    out = pl.pallas_call(
        dqn_kernel,
        out_shape=jax.ShapeDtypeStruct((b_pad, out_size), jnp.float32),
        grid=(b_pad // tb,),
        in_specs=[
            pl.BlockSpec((tb, in_size), lambda i: (i, 0), memory_space=vmem),
            resident(w1), resident(b1),
            resident(w2), resident(b2),
            resident(w3), resident(b3),
        ],
        out_specs=pl.BlockSpec((tb, out_size), lambda i: (i, 0),
                               memory_space=vmem),
        compiler_params=pltpu.CompilerParams(
            # TODO(synk): on v7x, verify megacore sharding of the batch axis
            # in a profile and switch to pltpu.CORE_PARALLEL if plain
            # "parallel" does not actually split tiles across the 2 TCs.
            dimension_semantics=("parallel",),
        ),
    )(xc, w1, b1, w2, b2, w3, b3)

    return out[:B] if b_pad != B else out


def init_params(input_size, output_size, key):
    """Deterministic synthetic init (PyTorch-style uniform fan-in bounds)."""
    def linear(key, fan_in, fan_out):
        kw, kb = jax.random.split(key)
        bound = 1.0 / jnp.sqrt(fan_in)
        # stored as (in, out): transpose of PyTorch's (out, in)
        w = jax.random.uniform(kw, (fan_in, fan_out), jnp.float32, -bound, bound)
        b = jax.random.uniform(kb, (fan_out,), jnp.float32, -bound, bound)
        return w, b

    k1, k2, k3 = jax.random.split(key, 3)
    w1, b1 = linear(k1, input_size, 128)
    w2, b2 = linear(k2, 128, 64)
    w3, b3 = linear(k3, 64, output_size)
    return (w1, b1, w2, b2, w3, b3)


def reference_forward(x, params):
    w1, b1, w2, b2, w3, b3 = params
    h1 = jnp.maximum(x @ w1 + b1, 0.0)
    h2 = jnp.maximum(h1 @ w2 + b2, 0.0)
    return h2 @ w3 + b3


if __name__ == "__main__":
    key = jax.random.PRNGKey(0)
    kx, kp = jax.random.split(key)

    input_size = 32   # state-vector size
    output_size = 4   # number of discrete actions
    params = init_params(input_size, output_size, kp)

    # --- small action-selection batch (single tile, no padding ops) ---
    # TODO(synk): at B~8 a standalone pallas_call is launch-overhead bound;
    # the real win is batching many env states per call (supported: any B).
    prep_f32 = prepare_params(params, jnp.float32)
    x_small = jax.random.normal(kx, (8, input_size), dtype=jnp.float32)
    out_small = dqn_forward(x_small, prep_f32)
    jax.block_until_ready(out_small)
    ref_small = reference_forward(x_small, params)
    assert out_small.shape == (8, output_size)
    assert jnp.allclose(out_small, ref_small, atol=1e-3, rtol=1e-3)

    # --- ragged batch (exercises the batch-padding path) ---
    x_rag = jax.random.normal(jax.random.PRNGKey(1), (53, input_size),
                              dtype=jnp.float32)
    out_rag = dqn_forward(x_rag, prep_f32)
    jax.block_until_ready(out_rag)
    assert out_rag.shape == (53, output_size)
    assert jnp.allclose(out_rag, reference_forward(x_rag, params),
                        atol=1e-3, rtol=1e-3)

    # --- multi-tile batch (2 grid steps, pipelined activation DMAs) ---
    x_big = jax.random.normal(jax.random.PRNGKey(2), (2048, input_size),
                              dtype=jnp.float32)
    out_big = dqn_forward(x_big, prep_f32, block_b=1024)
    jax.block_until_ready(out_big)
    assert out_big.shape == (2048, output_size)
    assert jnp.allclose(out_big, reference_forward(x_big, params),
                        atol=1e-3, rtol=1e-3)

    # --- bf16 compute path (halves x/weight HBM traffic; f32 accumulate) ---
    prep_bf16 = prepare_params(params, jnp.bfloat16)
    x_b = jax.random.normal(jax.random.PRNGKey(3), (256, input_size),
                            dtype=jnp.float32)
    out_b = dqn_forward(x_b, prep_bf16)
    jax.block_until_ready(out_b)
    assert out_b.shape == (256, output_size)
    assert jnp.allclose(out_b, reference_forward(x_b, params),
                        atol=5e-2, rtol=5e-2)

    print("KERNEL_OK")
</pallas_src>

<mosaic_0001>
module attributes {stable_mosaic.version = 11 : i64} {
  func.func @dqn_kernel(%arg0: i32, %arg1: memref<8x32xf32, #tpu.memory_space<vmem>>, %arg2: memref<32x128xf32, #tpu.memory_space<vmem>>, %arg3: memref<1x128xf32, #tpu.memory_space<vmem>>, %arg4: memref<128x64xf32, #tpu.memory_space<vmem>>, %arg5: memref<1x64xf32, #tpu.memory_space<vmem>>, %arg6: memref<64x4xf32, #tpu.memory_space<vmem>>, %arg7: memref<1x4xf32, #tpu.memory_space<vmem>>, %arg8: memref<8x4xf32, #tpu.memory_space<vmem>>) attributes {dimension_semantics = [#tpu.dimension_semantics<parallel>], iteration_bounds = array<i64: 1>, scalar_prefetch = 0 : i64, scratch_operands = 0 : i64, tpu.core_type = #tpu.core_type<tc>, window_params = [{transform_indices = @transform_0, window_bounds = array<i64: 8, 32>}, {pipeline_mode = #tpu.pipeline_mode<synchronous>, transform_indices = @transform_1, window_bounds = array<i64: 32, 128>}, {pipeline_mode = #tpu.pipeline_mode<synchronous>, transform_indices = @transform_2, window_bounds = array<i64: 1, 128>}, {pipeline_mode = #tpu.pipeline_mode<synchronous>, transform_indices = @transform_3, window_bounds = array<i64: 128, 64>}, {pipeline_mode = #tpu.pipeline_mode<synchronous>, transform_indices = @transform_4, window_bounds = array<i64: 1, 64>}, {pipeline_mode = #tpu.pipeline_mode<synchronous>, transform_indices = @transform_5, window_bounds = array<i64: 64, 4>}, {pipeline_mode = #tpu.pipeline_mode<synchronous>, transform_indices = @transform_6, window_bounds = array<i64: 1, 4>}, {transform_indices = @transform_7, window_bounds = array<i64: 8, 4>}]} {
    %c0 = arith.constant 0 : index
    %c0_0 = arith.constant 0 : index
    %0 = vector.load %arg1[%c0, %c0_0] : memref<8x32xf32, #tpu.memory_space<vmem>>, vector<8x32xf32>
    %c0_1 = arith.constant 0 : index
    %c0_2 = arith.constant 0 : index
    %1 = vector.load %arg2[%c0_1, %c0_2] : memref<32x128xf32, #tpu.memory_space<vmem>>, vector<32x128xf32>
    %cst = arith.constant dense<0.000000e+00> : vector<8x128xf32>
    %2 = tpu.matmul %0, %1, %cst {dimension_numbers = #tpu.dot_dimension_numbers<[1], [0], [0], [1], [0, 0, 1, 1], [], []>} : vector<8x32xf32>, vector<32x128xf32>, vector<8x128xf32> -> vector<8x128xf32>
    %c0_3 = arith.constant 0 : index
    %c0_4 = arith.constant 0 : index
    %3 = vector.load %arg3[%c0_3, %c0_4] : memref<1x128xf32, #tpu.memory_space<vmem>>, vector<1x128xf32>
    %4 = vector.broadcast %3 : vector<1x128xf32> to vector<8x128xf32>
    %5 = arith.addf %2, %4 : vector<8x128xf32>
    %cst_5 = arith.constant 0.000000e+00 : f32
    %6 = vector.broadcast %cst_5 : f32 to vector<8x128xf32>
    %7 = arith.maximumf %5, %6 : vector<8x128xf32>
    %c0_6 = arith.constant 0 : index
    %c0_7 = arith.constant 0 : index
    %8 = vector.load %arg4[%c0_6, %c0_7] : memref<128x64xf32, #tpu.memory_space<vmem>>, vector<128x64xf32>
    %cst_8 = arith.constant dense<0.000000e+00> : vector<8x64xf32>
    %9 = tpu.matmul %7, %8, %cst_8 {dimension_numbers = #tpu.dot_dimension_numbers<[1], [0], [0], [1], [0, 0, 1, 1], [], []>} : vector<8x128xf32>, vector<128x64xf32>, vector<8x64xf32> -> vector<8x64xf32>
    %c0_9 = arith.constant 0 : index
    %c0_10 = arith.constant 0 : index
    %10 = vector.load %arg5[%c0_9, %c0_10] : memref<1x64xf32, #tpu.memory_space<vmem>>, vector<1x64xf32>
    %11 = vector.broadcast %10 : vector<1x64xf32> to vector<8x64xf32>
    %12 = arith.addf %9, %11 : vector<8x64xf32>
    %cst_11 = arith.constant 0.000000e+00 : f32
    %13 = vector.broadcast %cst_11 : f32 to vector<8x64xf32>
    %14 = arith.maximumf %12, %13 : vector<8x64xf32>
    %c0_12 = arith.constant 0 : index
    %c0_13 = arith.constant 0 : index
    %15 = vector.load %arg6[%c0_12, %c0_13] : memref<64x4xf32, #tpu.memory_space<vmem>>, vector<64x4xf32>
    %cst_14 = arith.constant dense<0.000000e+00> : vector<8x4xf32>
    %16 = tpu.matmul %14, %15, %cst_14 {dimension_numbers = #tpu.dot_dimension_numbers<[1], [0], [0], [1], [0, 0, 1, 1], [], []>} : vector<8x64xf32>, vector<64x4xf32>, vector<8x4xf32> -> vector<8x4xf32>
    %c0_15 = arith.constant 0 : index
    %c0_16 = arith.constant 0 : index
    %17 = vector.load %arg7[%c0_15, %c0_16] : memref<1x4xf32, #tpu.memory_space<vmem>>, vector<1x4xf32>
    %18 = vector.broadcast %17 : vector<1x4xf32> to vector<8x4xf32>
    %19 = arith.addf %16, %18 : vector<8x4xf32>
    %c0_17 = arith.constant 0 : index
    %c0_18 = arith.constant 0 : index
    %20 = vector.load %arg8[%c0_17, %c0_18] : memref<8x4xf32, #tpu.memory_space<vmem>>, vector<8x4xf32>
    tpu.vector_store %arg8[%c0_17, %c0_18], %19 {strides = array<i32>} : memref<8x4xf32, #tpu.memory_space<vmem>>, vector<8x4xf32>,
    return
  }
  func.func @transform_0(%arg0: i32) -> (i32, i32) {
    %c0_i32 = arith.constant 0 : i32
    %c0_i32_0 = arith.constant 0 : i32
    return %arg0, %c0_i32 : i32, i32
  }
  func.func @transform_1(%arg0: i32) -> (i32, i32) {
    %c0_i32 = arith.constant 0 : i32
    %c0_i32_0 = arith.constant 0 : i32
    %c0_i32_1 = arith.constant 0 : i32
    return %c0_i32, %c0_i32_0 : i32, i32
  }
  func.func @transform_2(%arg0: i32) -> (i32, i32) {
    %c0_i32 = arith.constant 0 : i32
    %c0_i32_0 = arith.constant 0 : i32
    %c0_i32_1 = arith.constant 0 : i32
    return %c0_i32, %c0_i32_0 : i32, i32
  }
  func.func @transform_3(%arg0: i32) -> (i32, i32) {
    %c0_i32 = arith.constant 0 : i32
    %c0_i32_0 = arith.constant 0 : i32
    %c0_i32_1 = arith.constant 0 : i32
    return %c0_i32, %c0_i32_0 : i32, i32
  }
  func.func @transform_4(%arg0: i32) -> (i32, i32) {
    %c0_i32 = arith.constant 0 : i32
    %c0_i32_0 = arith.constant 0 : i32
    %c0_i32_1 = arith.constant 0 : i32
    return %c0_i32, %c0_i32_0 : i32, i32
  }
  func.func @transform_5(%arg0: i32) -> (i32, i32) {
    %c0_i32 = arith.constant 0 : i32
    %c0_i32_0 = arith.constant 0 : i32
    %c0_i32_1 = arith.constant 0 : i32
    return %c0_i32, %c0_i32_0 : i32, i32
  }
  func.func @transform_6(%arg0: i32) -> (i32, i32) {
    %c0_i32 = arith.constant 0 : i32
    %c0_i32_0 = arith.constant 0 : i32
    %c0_i32_1 = arith.constant 0 : i32
    return %c0_i32, %c0_i32_0 : i32, i32
  }
  func.func @transform_7(%arg0: i32) -> (i32, i32) {
    %c0_i32 = arith.constant 0 : i32
    %c0_i32_0 = arith.constant 0 : i32
    return %arg0, %c0_i32 : i32, i32
  }
}

</mosaic_0001>

<llo_original>
// kernel: tpu_custom_call.1
$region0: #{tpu_custom_call.1}
  #allocation0 [shape = 'u32[]', space=smem, size = 0x4, offset = 0x4, fixed_abs, tag = 'smem constant byte address 0x4 - core index']
  #allocation1 [shape = 'u32[144,128]{1,0:T(1,128)}', space=vmem, size = 0x12000, scoped, tag = 'internal scratch']
  %s0 = inlined_call_operand.vmem [shape: f32[8,32], index: 0, kind: input, shape index: {}]
  %s1 = inlined_call_operand.vmem [shape: f32[32,128], index: 1, kind: input, shape index: {}]
  %s2 = inlined_call_operand.vmem [shape: f32[1,128], index: 2, kind: input, shape index: {}]
  %s3 = inlined_call_operand.vmem [shape: f32[128,64], index: 3, kind: input, shape index: {}]
  %s4 = inlined_call_operand.vmem [shape: f32[1,64], index: 4, kind: input, shape index: {}]
  %s5 = inlined_call_operand.vmem [shape: f32[64,4], index: 5, kind: input, shape index: {}]
  %s6 = inlined_call_operand.vmem [shape: f32[1,4], index: 6, kind: input, shape index: {}]
  %s7 = inlined_call_operand.vmem [shape: f32[8,4], index: 7, kind: output, shape index: {}]
  %s8 = sld [smem:[#allocation0]]
  $region38: #{tpu_custom_call.1} parent=0
    _
  %s10 = ssub.s32 1, %s8
  %s11 = scalar_select 0, %s10, %s8
  // Predicated region
  $region2: #{tpu_custom_call.1} parent=0 // pred_check
    _
  $region3: #{tpu_custom_call.1} parent=0 // pred_check_branch
    %13 = sbr.rel (0) target = $region5
  $region4: #{tpu_custom_call.1} parent=0 // pred_region
    _
  $region5: #{tpu_custom_call.1} parent=0 // pred_fallthru
    _
  // Predicated region
  $region6: #{tpu_custom_call.1} parent=0 // pred_check
    _
  $region7: #{tpu_custom_call.1} parent=0 // pred_check_branch
    %15 = sbr.rel (0) target = $region9
  $region8: #{tpu_custom_call.1} parent=0 // pred_region
    _
  $region9: #{tpu_custom_call.1} parent=0 // pred_fallthru
    _
  // Predicated region
  $region10: #{tpu_custom_call.1} parent=0 // pred_check
    _
  $region11: #{tpu_custom_call.1} parent=0 // pred_check_branch
    %17 = sbr.rel (0) target = $region13
  $region12: #{tpu_custom_call.1} parent=0 // pred_region
    _
  $region13: #{tpu_custom_call.1} parent=0 // pred_fallthru
    _
  // Predicated region
  $region14: #{tpu_custom_call.1} parent=0 // pred_check
    _
  $region15: #{tpu_custom_call.1} parent=0 // pred_check_branch
    %19 = sbr.rel (0) target = $region17
  $region16: #{tpu_custom_call.1} parent=0 // pred_region
    _
  $region17: #{tpu_custom_call.1} parent=0 // pred_fallthru
    _
  // Predicated region
  $region18: #{tpu_custom_call.1} parent=0 // pred_check
    _
  $region19: #{tpu_custom_call.1} parent=0 // pred_check_branch
    %21 = sbr.rel (0) target = $region21
  $region20: #{tpu_custom_call.1} parent=0 // pred_region
    _
  $region21: #{tpu_custom_call.1} parent=0 // pred_fallthru
    _
  // Predicated region
  $region22: #{tpu_custom_call.1} parent=0 // pred_check
    _
  $region23: #{tpu_custom_call.1} parent=0 // pred_check_branch
    %23 = sbr.rel (0) target = $region25
  $region24: #{tpu_custom_call.1} parent=0 // pred_region
    _
  $region25: #{tpu_custom_call.1} parent=0 // pred_fallthru
    _
  // Predicated region
  $region26: #{tpu_custom_call.1} parent=0 // pred_check
    _
  $region27: #{tpu_custom_call.1} parent=0 // pred_check_branch
    %25 = sbr.rel (0) target = $region29
  $region28: #{tpu_custom_call.1} parent=0 // pred_region
    _
  $region29: #{tpu_custom_call.1} parent=0 // pred_fallthru
    _
  %v26 = vld [vmem:[%s0] sm:$0xff]
  %v27 = vld [vmem:[%s1] sm:$0xff]
  %v28 = vld [vmem:[%s1 + $0x8] sm:$0xff]
  %v29 = vld [vmem:[%s1 + $0x10] sm:$0xff]
  %v30 = vld [vmem:[%s1 + $0x18] sm:$0xff]
  %v31 = vld [vmem:[%s2] sm:$0x1]
  %v33 = vlaneseq
  %v34 = vshrl.u32 %v33, 7
  %v35 = vsub.s32 0, %v34
  %v36 = vrot.slane %v31, %v35
  %vm38 = vcmask 261120
  %v40 = vsel %vm38, %v26, 0
  %42 = vmatprep.subr.mxu0 0.0
  %43 = vmatpush1.msra.mxu0 %v27
  %44 = vmatprep.subr.mxu0 0.0
  %45 = vmatpush1.msra.mxu0 %v28
  %46 = vmatprep.subr.mxu0 0.0
  %47 = vmatpush1.msra.mxu0 %v29
  %48 = vmatprep.subr.mxu0 0.0
  %49 = vmatpush1.msra.mxu0 %v30
  %50 = vmatprep.subr.mxu0 0.0
  %51 = vmatpush1.msra.mxu0 0.0
  %52 = vmatprep.subr.mxu0 0.0
  %53 = vmatpush1.msra.mxu0 0.0
  %54 = vmatprep.subr.mxu0 0.0
  %55 = vmatpush1.msra.mxu0 0.0
  %56 = vmatprep.subr.mxu0 0.0
  %57 = vmatpush1.msra.mxu0 0.0
  %58 = vmatprep.subr.mxu0 0.0
  %59 = vmatpush1.msra.mxu0 0.0
  %60 = vmatprep.subr.mxu0 0.0
  %61 = vmatpush1.msra.mxu0 0.0
  %62 = vmatprep.subr.mxu0 0.0
  %63 = vmatpush1.msra.mxu0 0.0
  %64 = vmatprep.subr.mxu0 0.0
  %65 = vmatpush1.msra.mxu0 0.0
  %66 = vmatprep.subr.mxu0 0.0
  %67 = vmatpush1.msra.mxu0 0.0
  %68 = vmatprep.subr.mxu0 0.0
  %69 = vmatpush1.msra.mxu0 0.0
  %70 = vmatprep.subr.mxu0 0.0
  %71 = vmatpush1.msra.mxu0 0.0
  %72 = vmatprep.subr.mxu0 0.0
  %73 = vmatpush1.msra.mxu0 0.0
  %74 = vmatprep.subr.mxu0 0.0
  %75 = vmatpush1.msra.mxu0 0.0
  %76 = vmatprep.subr.mxu0 0.0
  %77 = vmatpush1.msra.mxu0 0.0
  %78 = vmatprep.subr.mxu0 0.0
  %79 = vmatpush1.msra.mxu0 0.0
  %80 = vmatprep.subr.mxu0 0.0
  %81 = vmatpush1.msra.mxu0 0.0
  %82 = vmatprep.subr.mxu0 0.0
  %83 = vmatpush1.msra.mxu0 0.0
  %84 = vmatprep.subr.mxu0 0.0
  %85 = vmatpush1.msra.mxu0 0.0
  %86 = vmatprep.subr.mxu0 0.0
  %87 = vmatpush1.msra.mxu0 0.0
  %88 = vmatprep.subr.mxu0 0.0
  %89 = vmatpush1.msra.mxu0 0.0
  %90 = vmatprep.subr.mxu0 0.0
  %91 = vmatpush1.msra.mxu0 0.0
  %92 = vmatprep.subr.mxu0 0.0
  %93 = vmatpush1.msra.mxu0 0.0
  %94 = vmatprep.subr.mxu0 0.0
  %95 = vmatpush1.msra.mxu0 0.0
  %96 = vmatprep.subr.mxu0 0.0
  %97 = vmatpush1.msra.mxu0 0.0
  %98 = vmatprep.subr.mxu0 0.0
  %99 = vmatpush1.msra.mxu0 0.0
  %100 = vmatprep.subr.mxu0 0.0
  %101 = vmatpush1.msra.mxu0 0.0
  %102 = vmatprep.subr.mxu0 0.0
  %103 = vmatpush1.msra.mxu0 0.0
  %104 = vmatprep.subr.mxu0 0.0
  %105 = vmatpush1.msra.mxu0 0.0
  %106 = vmatprep.mubr.f32.mxu0 0.0
  %107 = vmatmul.mubr.f32.gmra.mrb[0].mxu0 %v40
  %v108 = vpop.f32.mrb[0].mxu0
  %v109 = vadd.f32 %v36, %v108
  %v110 = vpop.f32.mrb[0].mxu0
  %111 = vdwg.mxu0
  %v112 = vmax.f32 %v109, 0.0
  %v113 = vld [vmem:[%s3] sm:$0xff]
  %v114 = vld [vmem:[%s3 + $0x8] sm:$0xff]
  %v115 = vld [vmem:[%s3 + $0x10] sm:$0xff]
  %v116 = vld [vmem:[%s3 + $0x18] sm:$0xff]
  %v117 = vld [vmem:[%s3 + $0x20] sm:$0xff]
  %v118 = vld [vmem:[%s3 + $0x28] sm:$0xff]
  %v119 = vld [vmem:[%s3 + $0x30] sm:$0xff]
  %v120 = vld [vmem:[%s3 + $0x38] sm:$0xff]
  %v121 = vld [vmem:[%s3 + $0x40] sm:$0xff]
  %v122 = vld [vmem:[%s3 + $0x48] sm:$0xff]
  %v123 = vld [vmem:[%s3 + $0x50] sm:$0xff]
  %v124 = vld [vmem:[%s3 + $0x58] sm:$0xff]
  %v125 = vld [vmem:[%s3 + $0x60] sm:$0xff]
  %v126 = vld [vmem:[%s3 + $0x68] sm:$0xff]
  %v127 = vld [vmem:[%s3 + $0x70] sm:$0xff]
  %v128 = vld [vmem:[%s3 + $0x78] sm:$0xff]
  %v129 = vld [vmem:[%s4] sm:$0x1]
  %v131 = vlaneseq
  %v132 = vshrl.u32 %v131, 7
  %v133 = vsub.s32 0, %v132
  %v134 = vrot.slane %v129, %v133
  %136 = vmatprep.subr.mxu0 0.0
  %137 = vmatpush1.msra.mxu0 %v113
  %138 = vmatprep.subr.mxu0 0.0
  %139 = vmatpush1.msra.mxu0 %v114
  %140 = vmatprep.subr.mxu0 0.0
  %141 = vmatpush1.msra.mxu0 %v115
  %142 = vmatprep.subr.mxu0 0.0
  %143 = vmatpush1.msra.mxu0 %v116
  %144 = vmatprep.subr.mxu0 0.0
  %145 = vmatpush1.msra.mxu0 %v117
  %146 = vmatprep.subr.mxu0 0.0
  %147 = vmatpush1.msra.mxu0 %v118
  %148 = vmatprep.subr.mxu0 0.0
  %149 = vmatpush1.msra.mxu0 %v119
  %150 = vmatprep.subr.mxu0 0.0
  %151 = vmatpush1.msra.mxu0 %v120
  %152 = vmatprep.subr.mxu0 0.0
  %153 = vmatpush1.msra.mxu0 %v121
  %154 = vmatprep.subr.mxu0 0.0
  %155 = vmatpush1.msra.mxu0 %v122
  %156 = vmatprep.subr.mxu0 0.0
  %157 = vmatpush1.msra.mxu0 %v123
  %158 = vmatprep.subr.mxu0 0.0
  %159 = vmatpush1.msra.mxu0 %v124
  %160 = vmatprep.subr.mxu0 0.0
  %161 = vmatpush1.msra.mxu0 %v125
  %162 = vmatprep.subr.mxu0 0.0
  %163 = vmatpush1.msra.mxu0 %v126
  %164 = vmatprep.subr.mxu0 0.0
  %165 = vmatpush1.msra.mxu0 %v127
  %166 = vmatprep.subr.mxu0 0.0
  %167 = vmatpush1.msra.mxu0 %v128
  %168 = vmatprep.subr.mxu0 0.0
  %169 = vmatpush1.msra.mxu0 0.0
  %170 = vmatprep.subr.mxu0 0.0
  %171 = vmatpush1.msra.mxu0 0.0
  %172 = vmatprep.subr.mxu0 0.0
  %173 = vmatpush1.msra.mxu0 0.0
  %174 = vmatprep.subr.mxu0 0.0
  %175 = vmatpush1.msra.mxu0 0.0
  %176 = vmatprep.subr.mxu0 0.0
  %177 = vmatpush1.msra.mxu0 0.0
  %178 = vmatprep.subr.mxu0 0.0
  %179 = vmatpush1.msra.mxu0 0.0
  %180 = vmatprep.subr.mxu0 0.0
  %181 = vmatpush1.msra.mxu0 0.0
  %182 = vmatprep.subr.mxu0 0.0
  %183 = vmatpush1.msra.mxu0 0.0
  %184 = vmatprep.subr.mxu0 0.0
  %185 = vmatpush1.msra.mxu0 0.0
  %186 = vmatprep.subr.mxu0 0.0
  %187 = vmatpush1.msra.mxu0 0.0
  %188 = vmatprep.subr.mxu0 0.0
  %189 = vmatpush1.msra.mxu0 0.0
  %190 = vmatprep.subr.mxu0 0.0
  %191 = vmatpush1.msra.mxu0 0.0
  %192 = vmatprep.subr.mxu0 0.0
  %193 = vmatpush1.msra.mxu0 0.0
  %194 = vmatprep.subr.mxu0 0.0
  %195 = vmatpush1.msra.mxu0 0.0
  %196 = vmatprep.subr.mxu0 0.0
  %197 = vmatpush1.msra.mxu0 0.0
  %198 = vmatprep.subr.mxu0 0.0
  %199 = vmatpush1.msra.mxu0 0.0
  %200 = vmatprep.mubr.f32.mxu0 0.0
  %201 = vmatmul.mubr.f32.gmra.mrb[0].mxu0 %v112
  %v202 = vpop.f32.mrb[0].mxu0
  %v203 = vadd.f32 %v134, %v202
  %v204 = vpop.f32.mrb[0].mxu0
  %205 = vdwg.mxu0
  %v206 = vmax.f32 %v203, 0.0
  %v207 = vld [vmem:[%s5] sm:$0xff]
  %v208 = vld [vmem:[%s5 + $0x8] sm:$0xff]
  %v209 = vld [vmem:[%s5 + $0x10] sm:$0xff]
  %v210 = vld [vmem:[%s5 + $0x18] sm:$0xff]
  %v211 = vld [vmem:[%s5 + $0x20] sm:$0xff]
  %v212 = vld [vmem:[%s5 + $0x28] sm:$0xff]
  %v213 = vld [vmem:[%s5 + $0x30] sm:$0xff]
  %v214 = vld [vmem:[%s5 + $0x38] sm:$0xff]
  %v215 = vld [vmem:[%s6] sm:$0x1]
  %v217 = vlaneseq
  %v218 = vshrl.u32 %v217, 7
  %v219 = vsub.s32 0, %v218
  %v220 = vrot.slane %v215, %v219
  %vm222 = vcmask 523264
  %v224 = vsel %vm222, %v206, 0
  %226 = vmatprep.subr.mxu0 0.0
  %227 = vmatpush1.msra.mxu0 %v207
  %228 = vmatprep.subr.mxu0 0.0
  %229 = vmatpush1.msra.mxu0 %v208
  %230 = vmatprep.subr.mxu0 0.0
  %231 = vmatpush1.msra.mxu0 %v209
  %232 = vmatprep.subr.mxu0 0.0
  %233 = vmatpush1.msra.mxu0 %v210
  %234 = vmatprep.subr.mxu0 0.0
  %235 = vmatpush1.msra.mxu0 %v211
  %236 = vmatprep.subr.mxu0 0.0
  %237 = vmatpush1.msra.mxu0 %v212
  %238 = vmatprep.subr.mxu0 0.0
  %239 = vmatpush1.msra.mxu0 %v213
  %240 = vmatprep.subr.mxu0 0.0
  %241 = vmatpush1.msra.mxu0 %v214
  %242 = vmatprep.subr.mxu0 0.0
  %243 = vmatpush1.msra.mxu0 0.0
  %244 = vmatprep.subr.mxu0 0.0
  %245 = vmatpush1.msra.mxu0 0.0
  %246 = vmatprep.subr.mxu0 0.0
  %247 = vmatpush1.msra.mxu0 0.0
  %248 = vmatprep.subr.mxu0 0.0
  %249 = vmatpush1.msra.mxu0 0.0
  %250 = vmatprep.subr.mxu0 0.0
  %251 = vmatpush1.msra.mxu0 0.0
  %252 = vmatprep.subr.mxu0 0.0
  %253 = vmatpush1.msra.mxu0 0.0
  %254 = vmatprep.subr.mxu0 0.0
  %255 = vmatpush1.msra.mxu0 0.0
  %256 = vmatprep.subr.mxu0 0.0
  %257 = vmatpush1.msra.mxu0 0.0
  %258 = vmatprep.subr.mxu0 0.0
  %259 = vmatpush1.msra.mxu0 0.0
  %260 = vmatprep.subr.mxu0 0.0
  %261 = vmatpush1.msra.mxu0 0.0
  %262 = vmatprep.subr.mxu0 0.0
  %263 = vmatpush1.msra.mxu0 0.0
  %264 = vmatprep.subr.mxu0 0.0
  %265 = vmatpush1.msra.mxu0 0.0
  %266 = vmatprep.subr.mxu0 0.0
  %267 = vmatpush1.msra.mxu0 0.0
  %268 = vmatprep.subr.mxu0 0.0
  %269 = vmatpush1.msra.mxu0 0.0
  %270 = vmatprep.subr.mxu0 0.0
  %271 = vmatpush1.msra.mxu0 0.0
  %272 = vmatprep.subr.mxu0 0.0
  %273 = vmatpush1.msra.mxu0 0.0
  %274 = vmatprep.subr.mxu0 0.0
  %275 = vmatpush1.msra.mxu0 0.0
  %276 = vmatprep.subr.mxu0 0.0
  %277 = vmatpush1.msra.mxu0 0.0
  %278 = vmatprep.subr.mxu0 0.0
  %279 = vmatpush1.msra.mxu0 0.0
  %280 = vmatprep.subr.mxu0 0.0
  %281 = vmatpush1.msra.mxu0 0.0
  %282 = vmatprep.subr.mxu0 0.0
  %283 = vmatpush1.msra.mxu0 0.0
  %284 = vmatprep.subr.mxu0 0.0
  %285 = vmatpush1.msra.mxu0 0.0
  %286 = vmatprep.subr.mxu0 0.0
  %287 = vmatpush1.msra.mxu0 0.0
  %288 = vmatprep.subr.mxu0 0.0
  %289 = vmatpush1.msra.mxu0 0.0
  %290 = vmatprep.mubr.f32.mxu0 0.0
  %291 = vmatmul.mubr.f32.gmra.mrb[0].mxu0 %v224
  %v292 = vpop.f32.mrb[0].mxu0
  %v293 = vadd.f32 %v220, %v292
  %v294 = vpop.f32.mrb[0].mxu0
  %295 = vdwg.mxu0
  %vm296 = vcmask 31744
  %297 = vst.msk [vmem:[%s7] sm:$0xff] %vm296, %v293
  // Predicated region
  $region30: #{tpu_custom_call.1} parent=0 // pred_check
    _
  $region31: #{tpu_custom_call.1} parent=0 // pred_check_branch
    %299 = sbr.rel (0) target = $region33
  $region32: #{tpu_custom_call.1} parent=0 // pred_region
    _
  $region33: #{tpu_custom_call.1} parent=0 // pred_fallthru
    _
  // Predicated region
  $region34: #{tpu_custom_call.1} parent=0 // pred_check
    _
  $region35: #{tpu_custom_call.1} parent=0 // pred_check_branch
    %301 = sbr.rel (0) target = $region37
  $region36: #{tpu_custom_call.1} parent=0 // pred_region
    _
  $region37: #{tpu_custom_call.1} parent=0 // pred_fallthru
    _

</llo_original>
